<compile_context>
chip_gen: v6e
topology: v6e:2x2x1
jax: 0.10.0
libtpu: 0.0.40
codegen_flags: <defaults>
</compile_context>

<pallas_src>
import functools

import jax
import jax.numpy as jnp
from jax.experimental import pallas as pl
from jax.experimental.pallas import tpu as pltpu

LANES = 128          # vreg lane width
NEG_BIG = -1e30      # drives padded softmax lanes to probability ~0


def _round_up(x, m):
    return (x + m - 1) // m * m


def _policy_net_kernel(x_ref, p_ref, o_ref):
    # x_ref: (tile_b, s_pad)      -- cols [0:S) real state features, rest zero pad
    # p_ref: (s_pad + 128, 128)   -- rows [0:s_pad) W1 block (b1 in row s_pad-1),
    #                                rows [s_pad:)  W2 block (b2/NEG_BIG in last row)
    # o_ref: (tile_b, 128)        -- lane-dense probability slab (bf16)
    s_pad = p_ref.shape[0] - LANES
    cdt = p_ref.dtype                                     # f32 or bf16 param slab

    x = x_ref[...].astype(cdt)                            # (tile_b, s_pad)
    w1 = p_ref[:s_pad, :]                                 # (s_pad, 128)
    b1 = p_ref[s_pad - 1:s_pad, :].astype(jnp.float32)    # (1, 128), zero x-lane in dot
    w2 = p_ref[s_pad:s_pad + LANES, :]                    # (128, 128)
    b2 = p_ref[s_pad + LANES - 1:s_pad + LANES, :].astype(jnp.float32)  # (1, 128) w/ NEG_BIG

    # fc1 + bias (broadcast add, VALU slot is idle) + ReLU.  Padded hidden lanes
    # stay exactly 0, so the W2 bias row is killed in the second matmul.
    h = jnp.dot(x, w1, preferred_element_type=jnp.float32) + b1
    h = jnp.maximum(h, 0.0)

    # fc2 + bias; padded logit lanes pick up NEG_BIG from the b2 broadcast row.
    logits = jnp.dot(h.astype(cdt), w2, preferred_element_type=jnp.float32) + b2

    # Numerically stable softmax over the 128 lanes (padded lanes exp to 0);
    # exact divide so rows normalize exactly before the bf16 store.
    m = jnp.max(logits, axis=-1, keepdims=True)
    e = jnp.exp(logits - m)
    probs = e / jnp.sum(e, axis=-1, keepdims=True)
    o_ref[...] = probs.astype(o_ref.dtype)


def pack_params(w1, b1, w2, b2, *, param_dtype=jnp.float32):
    """Pack (w1, b1, w2, b2) into one lane-dense (s_pad + 128, 128) slab.

    Layout (zeros unless noted):
      rows [0:S)       cols [0:H) : w1
      row  s_pad-1     cols [0:H) : b1        (x pad lane multiplies it by 0)
      rows [s_pad:+H)  cols [0:A) : w2
      row  s_pad+127   cols [0:A) : b2        (hidden pad lane multiplies it by 0)
      row  s_pad+127   cols [A:)  : NEG_BIG   (padded softmax lanes -> prob 0)

    Use param_dtype=jnp.bfloat16 on v5e for cheaper MXU passes / half the param
    DMA (validate against your tolerance first).
    """
    S, H = w1.shape
    H2, A = w2.shape
    assert H2 == H and H < LANES and A < LANES, "packed layout assumes small net"
    s_pad = _round_up(S + 1, 8)

    w1_blk = jnp.zeros((s_pad, LANES), jnp.float32)
    w1_blk = w1_blk.at[:S, :H].set(w1.astype(jnp.float32))
    w1_blk = w1_blk.at[s_pad - 1, :H].set(b1.reshape(-1).astype(jnp.float32))

    w2_blk = jnp.zeros((LANES, LANES), jnp.float32)
    w2_blk = w2_blk.at[:H, :A].set(w2.astype(jnp.float32))
    w2_blk = w2_blk.at[LANES - 1, :A].set(b2.reshape(-1).astype(jnp.float32))
    w2_blk = w2_blk.at[LANES - 1, A:].set(NEG_BIG)

    return jnp.concatenate([w1_blk, w2_blk], axis=0).astype(param_dtype)


def policy_net_forward(x, params_slab, action_dim, *, tile_b_cap=1024,
                       out_dtype=jnp.bfloat16):
    """softmax(relu(x @ w1 + b1) @ w2 + b2, axis=1) via the packed param slab."""
    B, S = x.shape
    s_pad = params_slab.shape[0] - LANES
    assert S < s_pad, "feature dim must leave room for the bias row"

    # Batch tiling: multiple of 8 rows, capped at tile_b_cap (amortize per-step
    # overhead on v5e/v6e); when the batch allows, force >= 2 grid steps so both
    # v7x TensorCores get work on the "parallel" batch axis.
    b8 = _round_up(B, 8)
    tile_b = min(tile_b_cap, b8)
    if b8 >= 16 and b8 // tile_b < 2:
        tile_b = _round_up((b8 + 1) // 2, 8)
    b_pad = _round_up(B, tile_b)

    # Only a trivial zero pad (rows to the tile, feature lanes 4 -> s_pad);
    # no ones-lane, no big wrapper-materialized array.
    x_p = x.astype(jnp.float32)
    if (b_pad - B) or (s_pad - S):
        x_p = jnp.pad(x_p, ((0, b_pad - B), (0, s_pad - S)))

    out_bytes = jnp.finfo(out_dtype).bits // 8
    par_bytes = jnp.finfo(params_slab.dtype).bits // 8
    cost = pl.CostEstimate(
        flops=2 * b_pad * (s_pad * LANES + LANES * LANES),
        transcendentals=b_pad * LANES,
        bytes_accessed=(x_p.size * 4 + params_slab.size * par_bytes
                        + b_pad * LANES * out_bytes),
    )

    out = pl.pallas_call(
        _policy_net_kernel,
        out_shape=jax.ShapeDtypeStruct((b_pad, LANES), out_dtype),
        grid=(b_pad // tile_b,),
        in_specs=[
            pl.BlockSpec((tile_b, s_pad), lambda i: (i, 0)),
            pl.BlockSpec((s_pad + LANES, LANES), lambda i: (0, 0)),  # resident params
        ],
        out_specs=pl.BlockSpec((tile_b, LANES), lambda i: (i, 0)),
        compiler_params=pltpu.CompilerParams(
            dimension_semantics=("parallel",),
        ),
        cost_estimate=cost,
    )(x_p, params_slab)

    return out[:B, :action_dim].astype(x.dtype)


def init_params(key, state_dim, hidden_dim, action_dim):
    # Deterministic init mimicking torch.nn.Linear (uniform +/- 1/sqrt(fan_in)).
    k1, k2, k3, k4 = jax.random.split(key, 4)
    bound1 = 1.0 / jnp.sqrt(state_dim)
    bound2 = 1.0 / jnp.sqrt(hidden_dim)
    w1 = jax.random.uniform(k1, (state_dim, hidden_dim), jnp.float32, -bound1, bound1)
    b1 = jax.random.uniform(k2, (1, hidden_dim), jnp.float32, -bound1, bound1)
    w2 = jax.random.uniform(k3, (hidden_dim, action_dim), jnp.float32, -bound2, bound2)
    b2 = jax.random.uniform(k4, (1, action_dim), jnp.float32, -bound2, bound2)
    return w1, b1, w2, b2


if __name__ == "__main__":
    # CartPole-like sizes: state_dim=4, hidden_dim=32, action_dim=2, batch=8.
    batch, state_dim, hidden_dim, action_dim = 8, 4, 32, 2

    key = jax.random.PRNGKey(0)
    kx, kp = jax.random.split(key)
    x = jax.random.normal(kx, (batch, state_dim), dtype=jnp.float32)
    w1, b1, w2, b2 = init_params(kp, state_dim, hidden_dim, action_dim)

    params_slab = pack_params(w1, b1, w2, b2)   # packed once, reused every call

    # Keep the pallas_call inside jit; at B=8 dispatch dominates, so in a real
    # rollout this lives inside the jitted/scanned environment-step loop.
    fwd = jax.jit(policy_net_forward, static_argnums=2)
    out = jax.block_until_ready(fwd(x, params_slab, action_dim))

    # Reference check in plain JAX.  Tolerance covers the bf16 output slab
    # (~2^-9 relative rounding on the probabilities); math inside is f32.
    h_ref = jnp.maximum(x @ w1 + b1, 0.0)
    ref = jax.nn.softmax(h_ref @ w2 + b2, axis=1)
    assert out.shape == (batch, action_dim)
    assert out.dtype == x.dtype
    assert jnp.allclose(out, ref, atol=5e-3, rtol=5e-3)
    assert jnp.allclose(jnp.sum(out, axis=1), 1.0, atol=5e-3)

    print("KERNEL_OK")
</pallas_src>

<mosaic_0001>
module attributes {stable_mosaic.version = 11 : i64} {
  func.func @_policy_net_kernel(%arg0: i32, %arg1: memref<8x8xf32, #tpu.memory_space<vmem>>, %arg2: memref<136x128xf32, #tpu.memory_space<vmem>>, %arg3: memref<8x128xbf16, #tpu.memory_space<vmem>>) attributes {dimension_semantics = [#tpu.dimension_semantics<parallel>], iteration_bounds = array<i64: 1>, scalar_prefetch = 0 : i64, scratch_operands = 0 : i64, tpu.core_type = #tpu.core_type<tc>, window_params = [{transform_indices = @transform_0, window_bounds = array<i64: 8, 8>}, {pipeline_mode = #tpu.pipeline_mode<synchronous>, transform_indices = @transform_1, window_bounds = array<i64: 136, 128>}, {transform_indices = @transform_2, window_bounds = array<i64: 8, 128>}]} {
    %c0 = arith.constant 0 : index
    %c0_0 = arith.constant 0 : index
    %0 = vector.load %arg1[%c0, %c0_0] : memref<8x8xf32, #tpu.memory_space<vmem>>, vector<8x8xf32>
    %c0_1 = arith.constant 0 : index
    %c0_2 = arith.constant 0 : index
    %1 = vector.load %arg2[%c0_1, %c0_2] : memref<136x128xf32, #tpu.memory_space<vmem>>, vector<8x128xf32>
    %c7 = arith.constant 7 : index
    %c0_3 = arith.constant 0 : index
    %2 = vector.load %arg2[%c7, %c0_3] : memref<136x128xf32, #tpu.memory_space<vmem>>, vector<1x128xf32>
    %c8 = arith.constant 8 : index
    %c0_4 = arith.constant 0 : index
    %3 = vector.load %arg2[%c8, %c0_4] : memref<136x128xf32, #tpu.memory_space<vmem>>, vector<128x128xf32>
    %c135 = arith.constant 135 : index
    %c0_5 = arith.constant 0 : index
    %4 = vector.load %arg2[%c135, %c0_5] : memref<136x128xf32, #tpu.memory_space<vmem>>, vector<1x128xf32>
    %cst = arith.constant dense<0.000000e+00> : vector<8x128xf32>
    %5 = tpu.matmul %0, %1, %cst {dimension_numbers = #tpu.dot_dimension_numbers<[1], [0], [0], [1], [0, 0, 1, 1], [], []>} : vector<8x8xf32>, vector<8x128xf32>, vector<8x128xf32> -> vector<8x128xf32>
    %6 = vector.broadcast %2 : vector<1x128xf32> to vector<8x128xf32>
    %7 = arith.addf %5, %6 : vector<8x128xf32>
    %cst_6 = arith.constant 0.000000e+00 : f32
    %8 = vector.broadcast %cst_6 : f32 to vector<8x128xf32>
    %9 = arith.maximumf %7, %8 : vector<8x128xf32>
    %cst_7 = arith.constant dense<0.000000e+00> : vector<8x128xf32>
    %10 = tpu.matmul %9, %3, %cst_7 {dimension_numbers = #tpu.dot_dimension_numbers<[1], [0], [0], [1], [0, 0, 1, 1], [], []>} : vector<8x128xf32>, vector<128x128xf32>, vector<8x128xf32> -> vector<8x128xf32>
    %11 = vector.broadcast %4 : vector<1x128xf32> to vector<8x128xf32>
    %12 = arith.addf %10, %11 : vector<8x128xf32>
    %cst_8 = arith.constant dense<0xFF800000> : vector<8xf32>
    %13 = vector.multi_reduction <maximumf>, %12, %cst_8 [1] : vector<8x128xf32> to vector<8xf32>
    %14 = vector.shape_cast %13 : vector<8xf32> to vector<8x1xf32>
    %15 = vector.broadcast %14 : vector<8x1xf32> to vector<8x128xf32>
    %16 = arith.subf %12, %15 : vector<8x128xf32>
    %17 = math.exp %16 : vector<8x128xf32>
    %cst_9 = arith.constant dense<0.000000e+00> : vector<8xf32>
    %18 = vector.multi_reduction <add>, %17, %cst_9 [1] : vector<8x128xf32> to vector<8xf32>
    %19 = vector.shape_cast %18 : vector<8xf32> to vector<8x1xf32>
    %20 = vector.broadcast %19 : vector<8x1xf32> to vector<8x128xf32>
    %21 = arith.divf %17, %20 : vector<8x128xf32>
    %22 = arith.truncf %21 : vector<8x128xf32> to vector<8x128xbf16>
    %c0_10 = arith.constant 0 : index
    %c0_11 = arith.constant 0 : index
    %23 = vector.load %arg3[%c0_10, %c0_11] : memref<8x128xbf16, #tpu.memory_space<vmem>>, vector<8x128xbf16>
    tpu.vector_store %arg3[%c0_10, %c0_11], %22 {strides = array<i32>} : memref<8x128xbf16, #tpu.memory_space<vmem>>, vector<8x128xbf16>,
    return
  }
  func.func @transform_0(%arg0: i32) -> (i32, i32) {
    %c0_i32 = arith.constant 0 : i32
    %c0_i32_0 = arith.constant 0 : i32
    return %arg0, %c0_i32 : i32, i32
  }
  func.func @transform_1(%arg0: i32) -> (i32, i32) {
    %c0_i32 = arith.constant 0 : i32
    %c0_i32_0 = arith.constant 0 : i32
    %c0_i32_1 = arith.constant 0 : i32
    return %c0_i32, %c0_i32_0 : i32, i32
  }
  func.func @transform_2(%arg0: i32) -> (i32, i32) {
    %c0_i32 = arith.constant 0 : i32
    %c0_i32_0 = arith.constant 0 : i32
    return %arg0, %c0_i32 : i32, i32
  }
}

</mosaic_0001>

<llo_original>
// kernel: policy_net_forward.1
$region0: #{policy_net_forward.1}
  #allocation0 [shape = 'u32[]', space=smem, size = 0x4, offset = 0x4, fixed_abs, tag = 'smem constant byte address 0x4 - core index']
  #allocation1 [shape = 'u32[144,128]{1,0:T(1,128)}', space=vmem, size = 0x12000, scoped, tag = 'internal scratch']
  %s0 = inlined_call_operand.vmem [shape: f32[8,8], index: 0, kind: input, shape index: {}]
  %s1 = inlined_call_operand.hbm [shape: f32[136,128], index: 1, kind: input, shape index: {}]
  %s2 = inlined_call_operand.vmem [shape: bf16[8,128], index: 2, kind: output, shape index: {}]
  %s3 = sld [smem:[#allocation0]]
  $region22: #{policy_net_forward.1} parent=0
    _
  %s5 = ssub.s32 1, %s3
  %s6 = scalar_select 0, %s5, %s3
  $region1: #{policy_net_forward.1} parent=0
    #allocation2 [shape = 'u8[69632]{0}', space=vmem, size = 0x11000, scoped, tag = 'input window, operand 1, single buffered']
    #allocation3 [shape = 's32[1]{0}', space=sflag, size = 0x4, scoped, tag = 'scoped memory for policy_net_forward.1']
    %7 = vsyncpa [#allocation3], 0
    // Predicated region
    $region2: #{policy_net_forward.1} parent=1 // pred_check
      _
    $region3: #{policy_net_forward.1} parent=1 // pred_check_branch
      %9 = sbr.rel (0) target = $region5
    $region4: #{policy_net_forward.1} parent=1 // pred_region
      _
    $region5: #{policy_net_forward.1} parent=1 // pred_fallthru
      _
    // Predicated region
    $region6: #{policy_net_forward.1} parent=1 // pred_check
      _
    $region7: #{policy_net_forward.1} parent=1 // pred_check_branch
      %11 = sbr.rel (0) target = $region9
    $region8: #{policy_net_forward.1} parent=1 // pred_region
      %s13 = ssub.s32 2176, 2176
      %14 = vsyncadd [#allocation3], %s13
      %s15 = sshll.u32 [#allocation2], 4
      %s16 = int_to_ptr.vmem [resolvable:$true] %s15
      %21 = dma.hbm_to_vmem [thread:$0]  %s1, 2176, %s16, [#allocation3], 128, 128, 8
    $region9: #{policy_net_forward.1} parent=1 // pred_fallthru
      _
    // Predicated region
    $region10: #{policy_net_forward.1} parent=1 // pred_check
      _
    $region11: #{policy_net_forward.1} parent=1 // pred_check_branch
      %23 = sbr.rel (0) target = $region13
    $region12: #{policy_net_forward.1} parent=1 // pred_region
      %24 = dma.done [#allocation3], 2176
    $region13: #{policy_net_forward.1} parent=1 // pred_fallthru
      _
    %v25 = vld [vmem:[%s0] sm:$0xff]
    %v26 = vld [vmem:[#allocation2] sm:$0xff]
    %v27 = vld [vmem:[#allocation2 + $0x7] sm:$0x1]
    %v28 = vld [vmem:[#allocation2 + $0x8] sm:$0xff]
    %v29 = vld [vmem:[#allocation2 + $0x10] sm:$0xff]
    %v30 = vld [vmem:[#allocation2 + $0x18] sm:$0xff]
    %v31 = vld [vmem:[#allocation2 + $0x20] sm:$0xff]
    %v32 = vld [vmem:[#allocation2 + $0x28] sm:$0xff]
    %v33 = vld [vmem:[#allocation2 + $0x30] sm:$0xff]
    %v34 = vld [vmem:[#allocation2 + $0x38] sm:$0xff]
    %v35 = vld [vmem:[#allocation2 + $0x40] sm:$0xff]
    %v36 = vld [vmem:[#allocation2 + $0x48] sm:$0xff]
    %v37 = vld [vmem:[#allocation2 + $0x50] sm:$0xff]
    %v38 = vld [vmem:[#allocation2 + $0x58] sm:$0xff]
    %v39 = vld [vmem:[#allocation2 + $0x60] sm:$0xff]
    %v40 = vld [vmem:[#allocation2 + $0x68] sm:$0xff]
    %v41 = vld [vmem:[#allocation2 + $0x70] sm:$0xff]
    %v42 = vld [vmem:[#allocation2 + $0x78] sm:$0xff]
    %v43 = vld [vmem:[#allocation2 + $0x80] sm:$0xff]
    %v44 = vld [vmem:[#allocation2 + $0x87] sm:$0x1]
    %v45 = vlaneseq
    %v46 = vshrl.u32 %v45, 7
    %v47 = vsub.s32 0, %v46
    %v48 = vrot.slane %v27, %v47
    %vm49 = vcmask 64512
    %v51 = vsel %vm49, %v25, 0
    %53 = vmatprep.subr.mxu0 0.0
    %54 = vmatpush1.msra.mxu0 0.0
    %55 = vmatprep.subr.mxu0 0.0
    %56 = vmatpush1.msra.mxu0 0.0
    %57 = vmatprep.subr.mxu0 0.0
    %58 = vmatpush1.msra.mxu0 0.0
    %59 = vmatprep.subr.mxu0 0.0
    %60 = vmatpush1.msra.mxu0 0.0
    %61 = vmatprep.subr.mxu0 0.0
    %62 = vmatpush1.msra.mxu0 0.0
    %63 = vmatprep.subr.mxu0 0.0
    %64 = vmatpush1.msra.mxu0 0.0
    %65 = vmatprep.subr.mxu0 0.0
    %66 = vmatpush1.msra.mxu0 0.0
    %67 = vmatprep.subr.mxu0 0.0
    %68 = vmatpush1.msra.mxu0 0.0
    %69 = vmatprep.subr.mxu0 0.0
    %70 = vmatpush1.msra.mxu0 0.0
    %71 = vmatprep.subr.mxu0 0.0
    %72 = vmatpush1.msra.mxu0 0.0
    %73 = vmatprep.subr.mxu0 0.0
    %74 = vmatpush1.msra.mxu0 0.0
    %75 = vmatprep.subr.mxu0 0.0
    %76 = vmatpush1.msra.mxu0 0.0
    %77 = vmatprep.subr.mxu0 0.0
    %78 = vmatpush1.msra.mxu0 0.0
    %79 = vmatprep.subr.mxu0 0.0
    %80 = vmatpush1.msra.mxu0 0.0
    %81 = vmatprep.subr.mxu0 0.0
    %82 = vmatpush1.msra.mxu0 0.0
    %83 = vmatprep.subr.mxu0 0.0
    %84 = vmatpush1.msra.mxu0 %v26
    %85 = vmatprep.subr.mxu0 0.0
    %86 = vmatpush2.msra.mxu0 0.0
    %87 = vmatprep.subr.mxu0 0.0
    %88 = vmatpush2.msra.mxu0 0.0
    %89 = vmatprep.subr.mxu0 0.0
    %90 = vmatpush2.msra.mxu0 0.0
    %91 = vmatprep.subr.mxu0 0.0
    %92 = vmatpush2.msra.mxu0 0.0
    %93 = vmatprep.subr.mxu0 0.0
    %94 = vmatpush2.msra.mxu0 0.0
    %95 = vmatprep.subr.mxu0 0.0
    %96 = vmatpush2.msra.mxu0 0.0
    %97 = vmatprep.subr.mxu0 0.0
    %98 = vmatpush2.msra.mxu0 0.0
    %99 = vmatprep.subr.mxu0 0.0
    %100 = vmatpush2.msra.mxu0 0.0
    %101 = vmatprep.subr.mxu0 0.0
    %102 = vmatpush2.msra.mxu0 0.0
    %103 = vmatprep.subr.mxu0 0.0
    %104 = vmatpush2.msra.mxu0 0.0
    %105 = vmatprep.subr.mxu0 0.0
    %106 = vmatpush2.msra.mxu0 0.0
    %107 = vmatprep.subr.mxu0 0.0
    %108 = vmatpush2.msra.mxu0 0.0
    %109 = vmatprep.subr.mxu0 0.0
    %110 = vmatpush2.msra.mxu0 0.0
    %111 = vmatprep.subr.mxu0 0.0
    %112 = vmatpush2.msra.mxu0 0.0
    %113 = vmatprep.subr.mxu0 0.0
    %114 = vmatpush2.msra.mxu0 0.0
    %115 = vmatprep.subr.mxu0 0.0
    %116 = vmatpush2.msra.mxu0 0.0
    %117 = vmatprep.mubr.f32.mxu0 0.0
    %118 = vmatmul.mubr.f32.gmra.mxu0 %v51
    %v119 = vpop.f32.mrf.mxu0
    %v120 = vadd.f32 %v48, %v119
    %v121 = vpop.f32.mrf.mxu0
    %122 = vdwg.mxu0
    %v123 = vmax.f32 %v120, 0.0
    %v124 = vlaneseq
    %v125 = vshrl.u32 %v124, 7
    %v126 = vsub.s32 0, %v125
    %v127 = vrot.slane %v44, %v126
    %128 = vmatprep.subr.mxu0 0.0
    %129 = vmatpush1.msra.mxu0 %v43
    %130 = vmatprep.subr.mxu0 0.0
    %131 = vmatpush1.msra.mxu0 %v42
    %132 = vmatprep.subr.mxu0 0.0
    %133 = vmatpush1.msra.mxu0 %v41
    %134 = vmatprep.subr.mxu0 0.0
    %135 = vmatpush1.msra.mxu0 %v40
    %136 = vmatprep.subr.mxu0 0.0
    %137 = vmatpush1.msra.mxu0 %v39
    %138 = vmatprep.subr.mxu0 0.0
    %139 = vmatpush1.msra.mxu0 %v38
    %140 = vmatprep.subr.mxu0 0.0
    %141 = vmatpush1.msra.mxu0 %v37
    %142 = vmatprep.subr.mxu0 0.0
    %143 = vmatpush1.msra.mxu0 %v36
    %144 = vmatprep.subr.mxu0 0.0
    %145 = vmatpush1.msra.mxu0 %v35
    %146 = vmatprep.subr.mxu0 0.0
    %147 = vmatpush1.msra.mxu0 %v34
    %148 = vmatprep.subr.mxu0 0.0
    %149 = vmatpush1.msra.mxu0 %v33
    %150 = vmatprep.subr.mxu0 0.0
    %151 = vmatpush1.msra.mxu0 %v32
    %152 = vmatprep.subr.mxu0 0.0
    %153 = vmatpush1.msra.mxu0 %v31
    %154 = vmatprep.subr.mxu0 0.0
    %155 = vmatpush1.msra.mxu0 %v30
    %156 = vmatprep.subr.mxu0 0.0
    %157 = vmatpush1.msra.mxu0 %v29
    %158 = vmatprep.subr.mxu0 0.0
    %159 = vmatpush1.msra.mxu0 %v28
    %160 = vmatprep.subr.mxu0 0.0
    %161 = vmatpush2.msra.mxu0 0.0
    %162 = vmatprep.subr.mxu0 0.0
    %163 = vmatpush2.msra.mxu0 0.0
    %164 = vmatprep.subr.mxu0 0.0
    %165 = vmatpush2.msra.mxu0 0.0
    %166 = vmatprep.subr.mxu0 0.0
    %167 = vmatpush2.msra.mxu0 0.0
    %168 = vmatprep.subr.mxu0 0.0
    %169 = vmatpush2.msra.mxu0 0.0
    %170 = vmatprep.subr.mxu0 0.0
    %171 = vmatpush2.msra.mxu0 0.0
    %172 = vmatprep.subr.mxu0 0.0
    %173 = vmatpush2.msra.mxu0 0.0
    %174 = vmatprep.subr.mxu0 0.0
    %175 = vmatpush2.msra.mxu0 0.0
    %176 = vmatprep.subr.mxu0 0.0
    %177 = vmatpush2.msra.mxu0 0.0
    %178 = vmatprep.subr.mxu0 0.0
    %179 = vmatpush2.msra.mxu0 0.0
    %180 = vmatprep.subr.mxu0 0.0
    %181 = vmatpush2.msra.mxu0 0.0
    %182 = vmatprep.subr.mxu0 0.0
    %183 = vmatpush2.msra.mxu0 0.0
    %184 = vmatprep.subr.mxu0 0.0
    %185 = vmatpush2.msra.mxu0 0.0
    %186 = vmatprep.subr.mxu0 0.0
    %187 = vmatpush2.msra.mxu0 0.0
    %188 = vmatprep.subr.mxu0 0.0
    %189 = vmatpush2.msra.mxu0 0.0
    %190 = vmatprep.subr.mxu0 0.0
    %191 = vmatpush2.msra.mxu0 0.0
    %192 = vmatprep.mubr.f32.mxu0 0.0
    %193 = vmatmul.mubr.f32.gmra.mxu0 %v123
    %v194 = vpop.f32.mrf.mxu0
    %v195 = vadd.f32 %v127, %v194
    %v196 = vpop.f32.mrf.mxu0
    %197 = vdwg.mxu0
    %198 = vmax.xlane.f32.xlu0 %v195
    %v199 = vpop.xlane.xlu0 %198
    %v200 = vsub.f32 %v195, %v199
    %v201 = vmul.f32 %v200, 1.442695
    %v202 = vpow.pop %v201
    %203 = vadd.xlane.f32.xlu0 %v202
    %v204 = vpop.xlane.xlu0 %203
    %v205 = vrcp.pop %v204
    %v206 = vmul.f32 %v202, %v205
    %v207 = vpack.c.bf16 %v206, %v206
    %208 = vst [vmem:[%s2] sm:$0xf] %v207
    // Predicated region
    $region14: #{policy_net_forward.1} parent=1 // pred_check
      _
    $region15: #{policy_net_forward.1} parent=1 // pred_check_branch
      %210 = sbr.rel (0) target = $region17
    $region16: #{policy_net_forward.1} parent=1 // pred_region
      _
    $region17: #{policy_net_forward.1} parent=1 // pred_fallthru
      _
    // Predicated region
    $region18: #{policy_net_forward.1} parent=1 // pred_check
      _
    $region19: #{policy_net_forward.1} parent=1 // pred_check_branch
      %212 = sbr.rel (0) target = $region21
    $region20: #{policy_net_forward.1} parent=1 // pred_region
      _
    $region21: #{policy_net_forward.1} parent=1 // pred_fallthru
      _
    %213 = vsyncpa [#allocation3], 1

</llo_original>
